<compile_context>
chip_gen: v7x
topology: tpu7x:2x2x1
jax: 0.10.0
libtpu: 0.0.40
codegen_flags: <defaults>
</compile_context>

<pallas_src>
import functools
import math

import jax
import jax.numpy as jnp
import numpy as np
from jax import lax
from jax.experimental import pallas as pl
from jax.experimental.pallas import tpu as pltpu

_NEG = -1e30          # finite "-inf" mask value; exp(_NEG - m) underflows to exact 0
_NEG_THRESH = -1e29   # rows whose running max never rose above this had no in-edges


# ---------------------------------------------------------------------------
# Kernel 1: fused per-head projection  feat = x @ W_all  (bf16 in, bf16 out)
# ---------------------------------------------------------------------------
def _proj_kernel(x_ref, w_ref, o_ref):
    o_ref[...] = jnp.dot(
        x_ref[...], w_ref[...], preferred_element_type=jnp.float32
    ).astype(o_ref.dtype)


# ---------------------------------------------------------------------------
# Kernel 2: masked edge softmax + aggregation, all heads per dst tile,
# flash-style online softmax over (block-sparse) src tiles.
# grid = (num_dst_tiles, num_src_tiles); src axis last, "arbitrary".
# ---------------------------------------------------------------------------
def _attn_kernel(tile_ids_ref, tile_cnt_ref,        # scalar prefetch (SMEM)
                 feat_q_ref, feat_k_ref, adj_ref,   # VMEM inputs
                 o_ref,                             # VMEM output
                 m_sc, l_sc, acc_sc,                # VMEM scratch
                 *, num_heads, out_feats):
    H, F = num_heads, out_feats
    tq = feat_q_ref.shape[0]
    qi = pl.program_id(0)
    ki = pl.program_id(1)

    @pl.when(ki == 0)
    def _init():
        m_sc[...] = jnp.full(m_sc.shape, _NEG, jnp.float32)
        l_sc[...] = jnp.zeros(l_sc.shape, jnp.float32)
        acc_sc[...] = jnp.zeros(acc_sc.shape, jnp.float32)

    # Skip padded (all-zero adjacency) src tiles entirely; their index_map also
    # repeats the previous block index so no fresh DMA is issued for them.
    @pl.when(ki < tile_cnt_ref[qi])
    def _compute():
        # Fold 1/sqrt(F) into q (tq*HF mults) instead of the (tq, tk) scores.
        scale = jnp.asarray(1.0 / math.sqrt(F), dtype=jnp.bfloat16)
        q = feat_q_ref[...] * scale            # (tq, H*F) bf16
        k = feat_k_ref[...]                    # (tk, H*F) bf16
        mask = adj_ref[...] != 0               # (tq, tk) bool

        m_all = m_sc[...]                      # (tq, H) f32
        l_all = l_sc[...]                      # (tq, H) f32

        m_cols, l_cols, r_cols, pv_blks = [], [], [], []
        for h in range(H):                     # static unroll over heads
            sl = slice(h * F, (h + 1) * F)
            # e_ij = (W h_i / sqrt(F)) . (W h_j); contract feature dims, f32 acc.
            s = lax.dot_general(q[:, sl], k[:, sl],
                                dimension_numbers=(((1,), (1,)), ((), ())),
                                preferred_element_type=jnp.float32)  # (tq, tk)
            s = jnp.where(mask, s, _NEG)       # single mask select per head
            m_prev = m_all[:, h:h + 1]                               # (tq, 1)
            m_new = jnp.maximum(m_prev, jnp.max(s, axis=-1, keepdims=True))
            r = jnp.exp(m_prev - m_new)                              # (tq, 1)
            # TODO(synk): on v6e/v7x a bf16 exp roughly doubles EUP throughput;
            # kept in f32 here for v5e safety / tight numerics.
            p = jnp.exp(s - m_new)             # masked lanes underflow to exact 0
            l_cols.append(r * l_all[:, h:h + 1] + jnp.sum(p, axis=-1, keepdims=True))
            pv_blks.append(jnp.dot(p.astype(jnp.bfloat16), k[:, sl],
                                   preferred_element_type=jnp.float32))  # (tq, F)
            m_cols.append(m_new)
            r_cols.append(r)

        m_sc[...] = jnp.concatenate(m_cols, axis=-1)
        l_sc[...] = jnp.concatenate(l_cols, axis=-1)
        # Lane-dense accumulator update: one full-width fma over (tq, H*F).
        r_full = jnp.concatenate(
            [jnp.broadcast_to(r_cols[h], (tq, F)) for h in range(H)], axis=-1)
        acc_sc[...] = r_full * acc_sc[...] + jnp.concatenate(pv_blks, axis=-1)

    @pl.when(ki == pl.num_programs(1) - 1)
    def _finalize():
        m_all = m_sc[...]                                  # (tq, H)
        l_all = l_sc[...]
        valid = m_all > jnp.float32(_NEG_THRESH)           # zero-in-degree guard
        safe_l = jnp.where(l_all > 0.0, l_all, 1.0)
        inv = jnp.where(valid, pl.reciprocal(safe_l, approx=True), 0.0)
        inv_full = jnp.concatenate(
            [jnp.broadcast_to(inv[:, h:h + 1], (tq, F)) for h in range(H)], axis=-1)
        # Single lane-dense full-block store (no per-head column-slice stores).
        o_ref[...] = (acc_sc[...] * inv_full).astype(o_ref.dtype)


# ---------------------------------------------------------------------------
# Wrapper
# ---------------------------------------------------------------------------
def _pick_tile(n, target, multiple):
    """Largest tile <= target dividing n that is a multiple of `multiple`;
    falls back to the full extent (a full-extent block is always legal)."""
    if n <= target:
        return n
    for t in range(min(target, n), multiple - 1, -1):
        if n % t == 0 and t % multiple == 0:
            return t
    # TODO(synk): pad N to a tile multiple (masked tail rows) instead of falling
    # back to a full (N, N) adjacency tile for awkward large N.
    return n


def _vmem_limit_and_targets():
    """Per-generation VMEM budget and tile-size targets.
    v5e/v6e have 128 MiB physical VMEM, v7x has 64 MiB."""
    cap = 64 * 1024 * 1024
    try:
        cap = int(pltpu.get_tpu_info().vmem_capacity_bytes)
    except Exception:
        pass
    if cap >= 100 * 1024 * 1024:                 # v5e / v6e
        return 96 * 1024 * 1024, 512, 1024
    return 48 * 1024 * 1024, 256, 512            # v7x


def dotgat_conv(x, w_all, adj, num_heads, *, tq=None, tk=None):
    """x: (N, Din) f32; w_all: (Din, H*F) f32; adj: (N, N) mask -> (N, H, F) f32."""
    N, Din = x.shape
    HF = w_all.shape[1]
    assert HF % num_heads == 0
    F = HF // num_heads

    vmem_limit, tq_target, tk_target = _vmem_limit_and_targets()

    # --- projection: bf16 operands to the MXU, bf16-resident feat ------------
    x_bf = x.astype(jnp.bfloat16)
    w_bf = w_all.astype(jnp.bfloat16)
    tm = _pick_tile(N, tq_target, 8)
    # TODO(synk): for large Din / HF also tile the K and HF axes (with an f32
    # accumulator) instead of keeping the full weight block resident; and set
    # pipeline_mode=pl.Buffered(1) on grid-invariant blocks to trim v7x VMEM.
    feat = pl.pallas_call(
        _proj_kernel,
        out_shape=jax.ShapeDtypeStruct((N, HF), jnp.bfloat16),
        grid_spec=pltpu.PrefetchScalarGridSpec(
            num_scalar_prefetch=0,
            grid=(N // tm,),
            in_specs=[
                pl.BlockSpec((tm, Din), lambda i: (i, 0)),
                pl.BlockSpec((Din, HF), lambda i: (0, 0)),
            ],
            out_specs=pl.BlockSpec((tm, HF), lambda i: (i, 0)),
        ),
        compiler_params=pltpu.CompilerParams(
            dimension_semantics=("parallel",),
            vmem_limit_bytes=vmem_limit,
        ),
    )(x_bf, w_bf)

    # --- attention tiling ----------------------------------------------------
    if tq is None:
        # Prefer >= 2 dst tiles so both v7x TensorCores get work.
        tq = _pick_tile(N, min(tq_target, max(32, N // 2)), 32)
    if tk is None:
        tk = _pick_tile(N, tk_target, 128)
    assert N % tq == 0 and N % tk == 0
    n_q, n_k = N // tq, N // tk

    # TODO(synk): on v5e a 1-bit packed adjacency (uint32 bitmask) would cut the
    # only O(N^2) HBM stream another 8x when the kernel is DMA-bound.
    adj_i8 = adj.astype(jnp.int8)

    # Block-sparse metadata (scalar prefetch): per dst tile, list the src tiles
    # that contain at least one edge; pad by repeating the last valid id so
    # padded steps reuse the resident block (no DMA) and are skipped in-kernel.
    blk_nz = (adj_i8 != 0).reshape(n_q, tq, n_k, tk).any(axis=(1, 3))   # (n_q, n_k)
    tile_cnt = blk_nz.sum(axis=1).astype(jnp.int32)                     # (n_q,)
    order = jnp.argsort(jnp.where(blk_nz, 0, 1), axis=1).astype(jnp.int32)
    last = jnp.take_along_axis(order, jnp.maximum(tile_cnt - 1, 0)[:, None], axis=1)
    pos = jnp.arange(n_k, dtype=jnp.int32)[None, :]
    tile_ids = jnp.where(pos < tile_cnt[:, None], order, last)          # (n_q, n_k)

    kernel = functools.partial(_attn_kernel, num_heads=num_heads, out_feats=F)
    out_flat = pl.pallas_call(
        kernel,
        out_shape=jax.ShapeDtypeStruct((N, HF), jnp.float32),
        grid_spec=pltpu.PrefetchScalarGridSpec(
            num_scalar_prefetch=2,
            grid=(n_q, n_k),
            in_specs=[
                pl.BlockSpec((tq, HF), lambda qi, ki, ids, cnt: (qi, 0)),
                pl.BlockSpec((tk, HF), lambda qi, ki, ids, cnt: (ids[qi, ki], 0)),
                pl.BlockSpec((tq, tk), lambda qi, ki, ids, cnt: (qi, ids[qi, ki])),
            ],
            out_specs=pl.BlockSpec((tq, HF), lambda qi, ki, ids, cnt: (qi, 0)),
            scratch_shapes=[
                pltpu.VMEM((tq, num_heads), jnp.float32),   # running max (tq, H)
                pltpu.VMEM((tq, num_heads), jnp.float32),   # running denom (tq, H)
                pltpu.VMEM((tq, HF), jnp.float32),          # lane-dense accumulator
            ],
        ),
        compiler_params=pltpu.CompilerParams(
            dimension_semantics=("parallel", "arbitrary"),
            vmem_limit_bytes=vmem_limit,
        ),
    )(tile_ids, tile_cnt, feat, feat, adj_i8)

    # Free reshape (no transpose): (N, H*F) -> (N, H, F), DGL output layout.
    return out_flat.reshape(N, num_heads, F)


# ---------------------------------------------------------------------------
# Pure-JAX reference replicating DGL DotGatConv semantics (dense graph).
# mxu_dtype=jnp.bfloat16 mirrors the kernel's bf16 MXU operands / bf16 feat;
# mxu_dtype=jnp.float32 is the exact DGL math.
# ---------------------------------------------------------------------------
def _reference(x, w_all, adj, num_heads, mxu_dtype=jnp.float32):
    N = x.shape[0]
    H = num_heads
    F = w_all.shape[1] // H
    md = mxu_dtype
    feat = jnp.dot(x.astype(md), w_all.astype(md),
                   preferred_element_type=jnp.float32).astype(md)
    f = feat.astype(jnp.float32).reshape(N, H, F)
    scale = jnp.asarray(1.0 / math.sqrt(F), dtype=md)
    q = (feat * scale).astype(md).astype(jnp.float32).reshape(N, H, F)
    scores = jnp.einsum("ihf,jhf->ijh", q, f)              # dst i, src j
    mask = (adj != 0)[:, :, None]
    masked = jnp.where(mask, scores, -jnp.inf)
    m = jnp.max(masked, axis=1, keepdims=True)
    p = jnp.where(mask, jnp.exp(masked - m), 0.0)
    den = jnp.sum(p, axis=1)                                # (N, H)
    num = jnp.einsum("ijh,jhf->ihf", p.astype(md).astype(jnp.float32), f)
    safe = jnp.where(den > 0.0, den, 1.0)
    return num / safe[:, :, None]


if __name__ == "__main__":
    # Module config: in_feats=32, out_feats=8, num_heads=4; graph with N=256 nodes.
    N, Din, F, H = 256, 32, 8, 4

    key = jax.random.PRNGKey(0)
    kx, kw = jax.random.split(key)

    x = jax.random.normal(kx, (N, Din), dtype=jnp.float32)
    # Deterministic init of nn.Linear(Din, H*F, bias=False) weight (fused heads).
    w_all = jax.random.normal(kw, (Din, H * F), dtype=jnp.float32) / math.sqrt(Din)

    # Sparse homogeneous graph: ring edges j -> (j+1) % N plus self-loops
    # (self-loops guarantee no zero in-degree nodes, as DGL recommends),
    # plus a couple of long-range edges so several adjacency tiles are nonzero.
    adj_np = np.zeros((N, N), dtype=np.int8)
    for j in range(N):
        adj_np[(j + 1) % N, j] = 1   # edge j -> j+1 (row = dst, col = src)
        adj_np[j, j] = 1             # self loop
    adj_np[7, 200] = 1
    adj_np[200, 7] = 1
    adj = jnp.asarray(adj_np)

    # tq=64 / tk=128 exercise a (4, 2) grid: multi-tile online softmax, the
    # block-sparse tile skipping and the parallel dst axis.
    out = dotgat_conv(x, w_all, adj, num_heads=H, tq=64, tk=128)
    out = jax.block_until_ready(out)

    # Tight check vs a reference with matched bf16 MXU precision, and a looser
    # sanity check vs the exact f32 DGL math.
    ref_mxu = _reference(x, w_all, adj, H, mxu_dtype=jnp.bfloat16)
    ref_f32 = _reference(x, w_all, adj, H, mxu_dtype=jnp.float32)
    np.testing.assert_allclose(np.asarray(out), np.asarray(ref_mxu), rtol=2e-2, atol=2e-2)
    np.testing.assert_allclose(np.asarray(out), np.asarray(ref_f32), rtol=8e-2, atol=8e-2)

    print("KERNEL_OK")
</pallas_src>

<mosaic_0001>
module attributes {stable_mosaic.version = 11 : i64} {
  func.func @_proj_kernel(%arg0: i32, %arg1: memref<256x32xbf16, #tpu.memory_space<vmem>>, %arg2: memref<32x32xbf16, #tpu.memory_space<vmem>>, %arg3: memref<256x32xbf16, #tpu.memory_space<vmem>>) attributes {dimension_semantics = [#tpu.dimension_semantics<parallel>], iteration_bounds = array<i64: 1>, scalar_prefetch = 0 : i64, scratch_operands = 0 : i64, tpu.core_type = #tpu.core_type<tc>, window_params = [{transform_indices = @transform_0, window_bounds = array<i64: 256, 32>}, {pipeline_mode = #tpu.pipeline_mode<synchronous>, transform_indices = @transform_1, window_bounds = array<i64: 32, 32>}, {transform_indices = @transform_2, window_bounds = array<i64: 256, 32>}]} {
    %c0 = arith.constant 0 : index
    %c0_0 = arith.constant 0 : index
    %0 = vector.load %arg1[%c0, %c0_0] : memref<256x32xbf16, #tpu.memory_space<vmem>>, vector<256x32xbf16>
    %c0_1 = arith.constant 0 : index
    %c0_2 = arith.constant 0 : index
    %1 = vector.load %arg2[%c0_1, %c0_2] : memref<32x32xbf16, #tpu.memory_space<vmem>>, vector<32x32xbf16>
    %cst = arith.constant dense<0.000000e+00> : vector<256x32xf32>
    %2 = tpu.matmul %0, %1, %cst {dimension_numbers = #tpu.dot_dimension_numbers<[1], [0], [0], [1], [0, 0, 1, 1], [], []>} : vector<256x32xbf16>, vector<32x32xbf16>, vector<256x32xf32> -> vector<256x32xf32>
    %3 = arith.truncf %2 : vector<256x32xf32> to vector<256x32xbf16>
    %c0_3 = arith.constant 0 : index
    %c0_4 = arith.constant 0 : index
    %4 = vector.load %arg3[%c0_3, %c0_4] : memref<256x32xbf16, #tpu.memory_space<vmem>>, vector<256x32xbf16>
    tpu.vector_store %arg3[%c0_3, %c0_4], %3 {strides = array<i32>} : memref<256x32xbf16, #tpu.memory_space<vmem>>, vector<256x32xbf16>,
    return
  }
  func.func @transform_0(%arg0: i32) -> (i32, i32) {
    %c0_i32 = arith.constant 0 : i32
    %c0_i32_0 = arith.constant 0 : i32
    return %arg0, %c0_i32 : i32, i32
  }
  func.func @transform_1(%arg0: i32) -> (i32, i32) {
    %c0_i32 = arith.constant 0 : i32
    %c0_i32_0 = arith.constant 0 : i32
    %c0_i32_1 = arith.constant 0 : i32
    return %c0_i32, %c0_i32_0 : i32, i32
  }
  func.func @transform_2(%arg0: i32) -> (i32, i32) {
    %c0_i32 = arith.constant 0 : i32
    %c0_i32_0 = arith.constant 0 : i32
    return %arg0, %c0_i32 : i32, i32
  }
}

</mosaic_0001>

<llo_original>
// kernel: tpu_custom_call.1
$region0: #{tpu_custom_call.1}
  #allocation0 [shape = 'u32[]', space=smem, size = 0x4, offset = 0x4, fixed_abs, tag = 'smem constant byte address 0x4 - core index']
  #allocation1 [shape = 'u32[144,128]{1,0:T(1,128)}', space=vmem, size = 0x12000, scoped, tag = 'internal scratch']
  %s0 = inlined_call_operand.vmem [shape: bf16[256,32], index: 0, kind: input, shape index: {}]
  %s1 = inlined_call_operand.vmem [shape: bf16[32,32], index: 1, kind: input, shape index: {}]
  %s2 = inlined_call_operand.vmem [shape: bf16[256,32], index: 2, kind: output, shape index: {}]
  %s3 = sld [smem:[#allocation0]]
  $region18: #{tpu_custom_call.1} parent=0
    _
  %s5 = ssub.s32 1, %s3
  %s6 = scalar_select 0, %s5, %s3
  // Predicated region
  $region2: #{tpu_custom_call.1} parent=0 // pred_check
    _
  $region3: #{tpu_custom_call.1} parent=0 // pred_check_branch
    %8 = sbr.rel (0) target = $region5
  $region4: #{tpu_custom_call.1} parent=0 // pred_region
    _
  $region5: #{tpu_custom_call.1} parent=0 // pred_fallthru
    _
  // Predicated region
  $region6: #{tpu_custom_call.1} parent=0 // pred_check
    _
  $region7: #{tpu_custom_call.1} parent=0 // pred_check_branch
    %10 = sbr.rel (0) target = $region9
  $region8: #{tpu_custom_call.1} parent=0 // pred_region
    _
  $region9: #{tpu_custom_call.1} parent=0 // pred_fallthru
    _
  %v12 = vld [vmem:[%s0] sm:$0xf]
  %v13 = vld [vmem:[%s0 + $0x4] sm:$0xf]
  %v14 = vld [vmem:[%s0 + $0x8] sm:$0xf]
  %v15 = vld [vmem:[%s0 + $0xc] sm:$0xf]
  %v16 = vld [vmem:[%s0 + $0x10] sm:$0xf]
  %v17 = vld [vmem:[%s0 + $0x14] sm:$0xf]
  %v18 = vld [vmem:[%s0 + $0x18] sm:$0xf]
  %v19 = vld [vmem:[%s0 + $0x1c] sm:$0xf]
  %v20 = vld [vmem:[%s0 + $0x20] sm:$0xf]
  %v21 = vld [vmem:[%s0 + $0x24] sm:$0xf]
  %v22 = vld [vmem:[%s0 + $0x28] sm:$0xf]
  %v23 = vld [vmem:[%s0 + $0x2c] sm:$0xf]
  %v24 = vld [vmem:[%s0 + $0x30] sm:$0xf]
  %v25 = vld [vmem:[%s0 + $0x34] sm:$0xf]
  %v26 = vld [vmem:[%s0 + $0x38] sm:$0xf]
  %v27 = vld [vmem:[%s0 + $0x3c] sm:$0xf]
  %v28 = vld [vmem:[%s0 + $0x40] sm:$0xf]
  %v29 = vld [vmem:[%s0 + $0x44] sm:$0xf]
  %v30 = vld [vmem:[%s0 + $0x48] sm:$0xf]
  %v31 = vld [vmem:[%s0 + $0x4c] sm:$0xf]
  %v32 = vld [vmem:[%s0 + $0x50] sm:$0xf]
  %v33 = vld [vmem:[%s0 + $0x54] sm:$0xf]
  %v34 = vld [vmem:[%s0 + $0x58] sm:$0xf]
  %v35 = vld [vmem:[%s0 + $0x5c] sm:$0xf]
  %v36 = vld [vmem:[%s0 + $0x60] sm:$0xf]
  %v37 = vld [vmem:[%s0 + $0x64] sm:$0xf]
  %v38 = vld [vmem:[%s0 + $0x68] sm:$0xf]
  %v39 = vld [vmem:[%s0 + $0x6c] sm:$0xf]
  %v40 = vld [vmem:[%s0 + $0x70] sm:$0xf]
  %v41 = vld [vmem:[%s0 + $0x74] sm:$0xf]
  %v42 = vld [vmem:[%s0 + $0x78] sm:$0xf]
  %v43 = vld [vmem:[%s0 + $0x7c] sm:$0xf]
  %v44 = vld [vmem:[%s1] sm:$0xf]
  %v45 = vld [vmem:[%s1 + $0x4] sm:$0xf]
  %v46 = vld [vmem:[%s1 + $0x8] sm:$0xf]
  %v47 = vld [vmem:[%s1 + $0xc] sm:$0xf]
  %v80 = vunpack.c.l.b16 %v12
  %v81 = vunpack.c.l.b16 %v13
  %v82 = vunpack.c.l.b16 %v14
  %v83 = vunpack.c.l.b16 %v15
  %v84 = vunpack.c.l.b16 %v16
  %v85 = vunpack.c.l.b16 %v17
  %v86 = vunpack.c.l.b16 %v18
  %v87 = vunpack.c.l.b16 %v19
  %v88 = vunpack.c.l.b16 %v20
  %v89 = vunpack.c.l.b16 %v21
  %v90 = vunpack.c.l.b16 %v22
  %v91 = vunpack.c.l.b16 %v23
  %v92 = vunpack.c.l.b16 %v24
  %v93 = vunpack.c.l.b16 %v25
  %v94 = vunpack.c.l.b16 %v26
  %v95 = vunpack.c.l.b16 %v27
  %v96 = vunpack.c.l.b16 %v28
  %v97 = vunpack.c.l.b16 %v29
  %v98 = vunpack.c.l.b16 %v30
  %v99 = vunpack.c.l.b16 %v31
  %v100 = vunpack.c.l.b16 %v32
  %v101 = vunpack.c.l.b16 %v33
  %v102 = vunpack.c.l.b16 %v34
  %v103 = vunpack.c.l.b16 %v35
  %v104 = vunpack.c.l.b16 %v36
  %v105 = vunpack.c.l.b16 %v37
  %v106 = vunpack.c.l.b16 %v38
  %v107 = vunpack.c.l.b16 %v39
  %v108 = vunpack.c.l.b16 %v40
  %v109 = vunpack.c.l.b16 %v41
  %v110 = vunpack.c.l.b16 %v42
  %v111 = vunpack.c.l.b16 %v43
  %v112 = vpack.c.b16 %v81, %v80
  %v113 = vpack.c.b16 %v83, %v82
  %v114 = vpack.c.b16 %v85, %v84
  %v115 = vpack.c.b16 %v87, %v86
  %v116 = vpack.c.b16 %v89, %v88
  %v117 = vpack.c.b16 %v91, %v90
  %v118 = vpack.c.b16 %v93, %v92
  %v119 = vpack.c.b16 %v95, %v94
  %v120 = vpack.c.b16 %v97, %v96
  %v121 = vpack.c.b16 %v99, %v98
  %v122 = vpack.c.b16 %v101, %v100
  %v123 = vpack.c.b16 %v103, %v102
  %v124 = vpack.c.b16 %v105, %v104
  %v125 = vpack.c.b16 %v107, %v106
  %v126 = vpack.c.b16 %v109, %v108
  %v127 = vpack.c.b16 %v111, %v110
  %v132 = vunpack.c.l.b16 %v44
  %v133 = vunpack.c.l.b16 %v45
  %v134 = vunpack.c.l.b16 %v46
  %v135 = vunpack.c.l.b16 %v47
  %v136 = vpack.c.b16 %v133, %v132
  %v137 = vpack.c.b16 %v135, %v134
  %vm140 = vcmask 261120
  %v142 = vsel %vm140, %v112, 0
  %v145 = vsel %vm140, %v113, 0
  %v148 = vsel %vm140, %v114, 0
  %v151 = vsel %vm140, %v115, 0
  %v154 = vsel %vm140, %v116, 0
  %v157 = vsel %vm140, %v117, 0
  %v160 = vsel %vm140, %v118, 0
  %v163 = vsel %vm140, %v119, 0
  %v166 = vsel %vm140, %v120, 0
  %v169 = vsel %vm140, %v121, 0
  %v172 = vsel %vm140, %v122, 0
  %v175 = vsel %vm140, %v123, 0
  %v178 = vsel %vm140, %v124, 0
  %v181 = vsel %vm140, %v125, 0
  %v184 = vsel %vm140, %v126, 0
  %v187 = vsel %vm140, %v127, 0
  %189 = vmatprep.subr.bf16.mxu0 0
  %190 = vmatpush1.bf16.msra.mxu0 %v136
  %191 = vmatprep.subr.bf16.mxu0 0
  %192 = vmatpush1.bf16.msra.mxu0 %v137
  %193 = vmatprep.subr.bf16.mxu0 0
  %194 = vmatpush1.bf16.msra.mxu0 0
  %195 = vmatprep.subr.bf16.mxu0 0
  %196 = vmatpush1.bf16.msra.mxu0 0
  %197 = vmatprep.subr.bf16.mxu0 0
  %198 = vmatpush1.bf16.msra.mxu0 0
  %199 = vmatprep.subr.bf16.mxu0 0
  %200 = vmatpush1.bf16.msra.mxu0 0
  %201 = vmatprep.subr.bf16.mxu0 0
  %202 = vmatpush1.bf16.msra.mxu0 0
  %203 = vmatprep.subr.bf16.mxu0 0
  %204 = vmatpush1.bf16.msra.mxu0 0
  %205 = vmatprep.subr.bf16.mxu0 0
  %206 = vmatpush1.bf16.msra.mxu0 0
  %207 = vmatprep.subr.bf16.mxu0 0
  %208 = vmatpush1.bf16.msra.mxu0 0
  %209 = vmatprep.subr.bf16.mxu0 0
  %210 = vmatpush1.bf16.msra.mxu0 0
  %211 = vmatprep.subr.bf16.mxu0 0
  %212 = vmatpush1.bf16.msra.mxu0 0
  %213 = vmatprep.subr.bf16.mxu0 0
  %214 = vmatpush1.bf16.msra.mxu0 0
  %215 = vmatprep.subr.bf16.mxu0 0
  %216 = vmatpush1.bf16.msra.mxu0 0
  %217 = vmatprep.subr.bf16.mxu0 0
  %218 = vmatpush1.bf16.msra.mxu0 0
  %219 = vmatprep.subr.bf16.mxu0 0
  %220 = vmatpush1.bf16.msra.mxu0 0
  %221 = vmatprep.mubr.bf16.mxu0 0
  %222 = vmatmul.mubr.bf16.gmra.mrb[0].mxu0 %v142
  %v223 = vpop.f32.mrb[0].mxu0
  %v224 = vadd.f32 0.0, %v223
  %v225 = vpop.f32.mrb[0].mxu0
  %v226 = vpop.f32.mrb[0].mxu0
  %v227 = vadd.f32 0.0, %v226
  %v228 = vpop.f32.mrb[0].mxu0
  %229 = vmatprep.mubr.bf16.mxu0 0
  %230 = vmatmul.mubr.bf16.gmra.mrb[0].mxu0 %v145
  %v231 = vpop.f32.mrb[0].mxu0
  %v232 = vadd.f32 0.0, %v231
  %v233 = vpop.f32.mrb[0].mxu0
  %v234 = vpop.f32.mrb[0].mxu0
  %v235 = vadd.f32 0.0, %v234
  %v236 = vpop.f32.mrb[0].mxu0
  %237 = vmatprep.mubr.bf16.mxu0 0
  %238 = vmatmul.mubr.bf16.gmra.mrb[0].mxu0 %v148
  %v239 = vpop.f32.mrb[0].mxu0
  %v240 = vadd.f32 0.0, %v239
  %v241 = vpop.f32.mrb[0].mxu0
  %v242 = vpop.f32.mrb[0].mxu0
  %v243 = vadd.f32 0.0, %v242
  %v244 = vpop.f32.mrb[0].mxu0
  %245 = vmatprep.mubr.bf16.mxu0 0
  %246 = vmatmul.mubr.bf16.gmra.mrb[0].mxu0 %v151
  %v247 = vpop.f32.mrb[0].mxu0
  %v248 = vadd.f32 0.0, %v247
  %v249 = vpop.f32.mrb[0].mxu0
  %v250 = vpop.f32.mrb[0].mxu0
  %v251 = vadd.f32 0.0, %v250
  %v252 = vpop.f32.mrb[0].mxu0
  %253 = vmatprep.mubr.bf16.mxu0 0
  %254 = vmatmul.mubr.bf16.gmra.mrb[0].mxu0 %v154
  %v255 = vpop.f32.mrb[0].mxu0
  %v256 = vadd.f32 0.0, %v255
  %v257 = vpop.f32.mrb[0].mxu0
  %v258 = vpop.f32.mrb[0].mxu0
  %v259 = vadd.f32 0.0, %v258
  %v260 = vpop.f32.mrb[0].mxu0
  %261 = vmatprep.mubr.bf16.mxu0 0
  %262 = vmatmul.mubr.bf16.gmra.mrb[0].mxu0 %v157
  %v263 = vpop.f32.mrb[0].mxu0
  %v264 = vadd.f32 0.0, %v263
  %v265 = vpop.f32.mrb[0].mxu0
  %v266 = vpop.f32.mrb[0].mxu0
  %v267 = vadd.f32 0.0, %v266
  %v268 = vpop.f32.mrb[0].mxu0
  %269 = vmatprep.mubr.bf16.mxu0 0
  %270 = vmatmul.mubr.bf16.gmra.mrb[0].mxu0 %v160
  %v271 = vpop.f32.mrb[0].mxu0
  %v272 = vadd.f32 0.0, %v271
  %v273 = vpop.f32.mrb[0].mxu0
  %v274 = vpop.f32.mrb[0].mxu0
  %v275 = vadd.f32 0.0, %v274
  %v276 = vpop.f32.mrb[0].mxu0
  %277 = vmatprep.mubr.bf16.mxu0 0
  %278 = vmatmul.mubr.bf16.gmra.mrb[0].mxu0 %v163
  %v279 = vpop.f32.mrb[0].mxu0
  %v280 = vadd.f32 0.0, %v279
  %v281 = vpop.f32.mrb[0].mxu0
  %v282 = vpop.f32.mrb[0].mxu0
  %v283 = vadd.f32 0.0, %v282
  %v284 = vpop.f32.mrb[0].mxu0
  %285 = vmatprep.mubr.bf16.mxu0 0
  %286 = vmatmul.mubr.bf16.gmra.mrb[0].mxu0 %v166
  %v287 = vpop.f32.mrb[0].mxu0
  %v288 = vadd.f32 0.0, %v287
  %v289 = vpop.f32.mrb[0].mxu0
  %v290 = vpop.f32.mrb[0].mxu0
  %v291 = vadd.f32 0.0, %v290
  %v292 = vpop.f32.mrb[0].mxu0
  %293 = vmatprep.mubr.bf16.mxu0 0
  %294 = vmatmul.mubr.bf16.gmra.mrb[0].mxu0 %v169
  %v295 = vpop.f32.mrb[0].mxu0
  %v296 = vadd.f32 0.0, %v295
  %v297 = vpop.f32.mrb[0].mxu0
  %v298 = vpop.f32.mrb[0].mxu0
  %v299 = vadd.f32 0.0, %v298
  %v300 = vpop.f32.mrb[0].mxu0
  %301 = vmatprep.mubr.bf16.mxu0 0
  %302 = vmatmul.mubr.bf16.gmra.mrb[0].mxu0 %v172
  %v303 = vpop.f32.mrb[0].mxu0
  %v304 = vadd.f32 0.0, %v303
  %v305 = vpop.f32.mrb[0].mxu0
  %v306 = vpop.f32.mrb[0].mxu0
  %v307 = vadd.f32 0.0, %v306
  %v308 = vpop.f32.mrb[0].mxu0
  %309 = vmatprep.mubr.bf16.mxu0 0
  %310 = vmatmul.mubr.bf16.gmra.mrb[0].mxu0 %v175
  %v311 = vpop.f32.mrb[0].mxu0
  %v312 = vadd.f32 0.0, %v311
  %v313 = vpop.f32.mrb[0].mxu0
  %v314 = vpop.f32.mrb[0].mxu0
  %v315 = vadd.f32 0.0, %v314
  %v316 = vpop.f32.mrb[0].mxu0
  %317 = vmatprep.mubr.bf16.mxu0 0
  %318 = vmatmul.mubr.bf16.gmra.mrb[0].mxu0 %v178
  %v319 = vpop.f32.mrb[0].mxu0
  %v320 = vadd.f32 0.0, %v319
  %v321 = vpop.f32.mrb[0].mxu0
  %v322 = vpop.f32.mrb[0].mxu0
  %v323 = vadd.f32 0.0, %v322
  %v324 = vpop.f32.mrb[0].mxu0
  %325 = vmatprep.mubr.bf16.mxu0 0
  %326 = vmatmul.mubr.bf16.gmra.mrb[0].mxu0 %v181
  %v327 = vpop.f32.mrb[0].mxu0
  %v328 = vadd.f32 0.0, %v327
  %v329 = vpop.f32.mrb[0].mxu0
  %v330 = vpop.f32.mrb[0].mxu0
  %v331 = vadd.f32 0.0, %v330
  %v332 = vpop.f32.mrb[0].mxu0
  %333 = vmatprep.mubr.bf16.mxu0 0
  %334 = vmatmul.mubr.bf16.gmra.mrb[0].mxu0 %v184
  %v335 = vpop.f32.mrb[0].mxu0
  %v336 = vadd.f32 0.0, %v335
  %v337 = vpop.f32.mrb[0].mxu0
  %v338 = vpop.f32.mrb[0].mxu0
  %v339 = vadd.f32 0.0, %v338
  %v340 = vpop.f32.mrb[0].mxu0
  %341 = vmatprep.mubr.bf16.mxu0 0
  %342 = vmatmul.mubr.bf16.gmra.mrb[0].mxu0 %v187
  %v343 = vpop.f32.mrb[0].mxu0
  %v344 = vadd.f32 0.0, %v343
  %v345 = vpop.f32.mrb[0].mxu0
  %v346 = vpop.f32.mrb[0].mxu0
  %v347 = vadd.f32 0.0, %v346
  %v348 = vpop.f32.mrb[0].mxu0
  %349 = vdwg.mxu0
  %v350 = vpack.c.bf16 %v227, %v224
  %v351 = vpack.c.bf16 %v235, %v232
  %v352 = vpack.c.bf16 %v243, %v240
  %v353 = vpack.c.bf16 %v251, %v248
  %v354 = vpack.c.bf16 %v259, %v256
  %v355 = vpack.c.bf16 %v267, %v264
  %v356 = vpack.c.bf16 %v275, %v272
  %v357 = vpack.c.bf16 %v283, %v280
  %v358 = vpack.c.bf16 %v291, %v288
  %v359 = vpack.c.bf16 %v299, %v296
  %v360 = vpack.c.bf16 %v307, %v304
  %v361 = vpack.c.bf16 %v315, %v312
  %v362 = vpack.c.bf16 %v323, %v320
  %v363 = vpack.c.bf16 %v331, %v328
  %v364 = vpack.c.bf16 %v339, %v336
  %v365 = vpack.c.bf16 %v347, %v344
  %v382 = vunpack.c.l.b16 %v350
  %v383 = vunpack.c.h.b16 %v350
  %v384 = vunpack.c.l.b16 %v351
  %v385 = vunpack.c.h.b16 %v351
  %v386 = vunpack.c.l.b16 %v352
  %v387 = vunpack.c.h.b16 %v352
  %v388 = vunpack.c.l.b16 %v353
  %v389 = vunpack.c.h.b16 %v353
  %v390 = vunpack.c.l.b16 %v354
  %v391 = vunpack.c.h.b16 %v354
  %v392 = vunpack.c.l.b16 %v355
  %v393 = vunpack.c.h.b16 %v355
  %v394 = vunpack.c.l.b16 %v356
  %v395 = vunpack.c.h.b16 %v356
  %v396 = vunpack.c.l.b16 %v357
  %v397 = vunpack.c.h.b16 %v357
  %v398 = vunpack.c.l.b16 %v358
  %v399 = vunpack.c.h.b16 %v358
  %v400 = vunpack.c.l.b16 %v359
  %v401 = vunpack.c.h.b16 %v359
  %v402 = vunpack.c.l.b16 %v360
  %v403 = vunpack.c.h.b16 %v360
  %v404 = vunpack.c.l.b16 %v361
  %v405 = vunpack.c.h.b16 %v361
  %v406 = vunpack.c.l.b16 %v362
  %v407 = vunpack.c.h.b16 %v362
  %v408 = vunpack.c.l.b16 %v363
  %v409 = vunpack.c.h.b16 %v363
  %v410 = vunpack.c.l.b16 %v364
  %v411 = vunpack.c.h.b16 %v364
  %v412 = vunpack.c.l.b16 %v365
  %v413 = vunpack.c.h.b16 %v365
  %v414 = vpack.c.b16 %v382, %v382
  %v415 = vpack.c.b16 %v383, %v383
  %v416 = vpack.c.b16 %v384, %v384
  %v417 = vpack.c.b16 %v385, %v385
  %v418 = vpack.c.b16 %v386, %v386
  %v419 = vpack.c.b16 %v387, %v387
  %v420 = vpack.c.b16 %v388, %v388
  %v421 = vpack.c.b16 %v389, %v389
  %v422 = vpack.c.b16 %v390, %v390
  %v423 = vpack.c.b16 %v391, %v391
  %v424 = vpack.c.b16 %v392, %v392
  %v425 = vpack.c.b16 %v393, %v393
  %v426 = vpack.c.b16 %v394, %v394
  %v427 = vpack.c.b16 %v395, %v395
  %v428 = vpack.c.b16 %v396, %v396
  %v429 = vpack.c.b16 %v397, %v397
  %v430 = vpack.c.b16 %v398, %v398
  %v431 = vpack.c.b16 %v399, %v399
  %v432 = vpack.c.b16 %v400, %v400
  %v433 = vpack.c.b16 %v401, %v401
  %v434 = vpack.c.b16 %v402, %v402
  %v435 = vpack.c.b16 %v403, %v403
  %v436 = vpack.c.b16 %v404, %v404
  %v437 = vpack.c.b16 %v405, %v405
  %v438 = vpack.c.b16 %v406, %v406
  %v439 = vpack.c.b16 %v407, %v407
  %v440 = vpack.c.b16 %v408, %v408
  %v441 = vpack.c.b16 %v409, %v409
  %v442 = vpack.c.b16 %v410, %v410
  %v443 = vpack.c.b16 %v411, %v411
  %v444 = vpack.c.b16 %v412, %v412
  %v445 = vpack.c.b16 %v413, %v413
  %vm478 = vcmask 257024
  %479 = vst.msk [vmem:[%s2] sm:$0xf] %vm478, %v414
  %480 = vst.msk [vmem:[%s2 + $0x4] sm:$0xf] %vm478, %v415
  %481 = vst.msk [vmem:[%s2 + $0x8] sm:$0xf] %vm478, %v416
  %482 = vst.msk [vmem:[%s2 + $0xc] sm:$0xf] %vm478, %v417
  %483 = vst.msk [vmem:[%s2 + $0x10] sm:$0xf] %vm478, %v418
  %484 = vst.msk [vmem:[%s2 + $0x14] sm:$0xf] %vm478, %v419
  %485 = vst.msk [vmem:[%s2 + $0x18] sm:$0xf] %vm478, %v420
  %486 = vst.msk [vmem:[%s2 + $0x1c] sm:$0xf] %vm478, %v421
  %487 = vst.msk [vmem:[%s2 + $0x20] sm:$0xf] %vm478, %v422
  %488 = vst.msk [vmem:[%s2 + $0x24] sm:$0xf] %vm478, %v423
  %489 = vst.msk [vmem:[%s2 + $0x28] sm:$0xf] %vm478, %v424
  %490 = vst.msk [vmem:[%s2 + $0x2c] sm:$0xf] %vm478, %v425
  %491 = vst.msk [vmem:[%s2 + $0x30] sm:$0xf] %vm478, %v426
  %492 = vst.msk [vmem:[%s2 + $0x34] sm:$0xf] %vm478, %v427
  %493 = vst.msk [vmem:[%s2 + $0x38] sm:$0xf] %vm478, %v428
  %494 = vst.msk [vmem:[%s2 + $0x3c] sm:$0xf] %vm478, %v429
  %495 = vst.msk [vmem:[%s2 + $0x40] sm:$0xf] %vm478, %v430
  %496 = vst.msk [vmem:[%s2 + $0x44] sm:$0xf] %vm478, %v431
  %497 = vst.msk [vmem:[%s2 + $0x48] sm:$0xf] %vm478, %v432
  %498 = vst.msk [vmem:[%s2 + $0x4c] sm:$0xf] %vm478, %v433
  %499 = vst.msk [vmem:[%s2 + $0x50] sm:$0xf] %vm478, %v434
  %500 = vst.msk [vmem:[%s2 + $0x54] sm:$0xf] %vm478, %v435
  %501 = vst.msk [vmem:[%s2 + $0x58] sm:$0xf] %vm478, %v436
  %502 = vst.msk [vmem:[%s2 + $0x5c] sm:$0xf] %vm478, %v437
  %503 = vst.msk [vmem:[%s2 + $0x60] sm:$0xf] %vm478, %v438
  %504 = vst.msk [vmem:[%s2 + $0x64] sm:$0xf] %vm478, %v439
  %505 = vst.msk [vmem:[%s2 + $0x68] sm:$0xf] %vm478, %v440
  %506 = vst.msk [vmem:[%s2 + $0x6c] sm:$0xf] %vm478, %v441
  %507 = vst.msk [vmem:[%s2 + $0x70] sm:$0xf] %vm478, %v442
  %508 = vst.msk [vmem:[%s2 + $0x74] sm:$0xf] %vm478, %v443
  %509 = vst.msk [vmem:[%s2 + $0x78] sm:$0xf] %vm478, %v444
  %510 = vst.msk [vmem:[%s2 + $0x7c] sm:$0xf] %vm478, %v445
  // Predicated region
  $region10: #{tpu_custom_call.1} parent=0 // pred_check
    _
  $region11: #{tpu_custom_call.1} parent=0 // pred_check_branch
    %512 = sbr.rel (0) target = $region13
  $region12: #{tpu_custom_call.1} parent=0 // pred_region
    _
  $region13: #{tpu_custom_call.1} parent=0 // pred_fallthru
    _
  // Predicated region
  $region14: #{tpu_custom_call.1} parent=0 // pred_check
    _
  $region15: #{tpu_custom_call.1} parent=0 // pred_check_branch
    %514 = sbr.rel (0) target = $region17
  $region16: #{tpu_custom_call.1} parent=0 // pred_region
    _
  $region17: #{tpu_custom_call.1} parent=0 // pred_fallthru
    _

</llo_original>
